<compile_context>
chip_gen: v7x
topology: tpu7x:2x2x1
jax: 0.10.0
libtpu: 0.0.40
codegen_flags: <defaults>
</compile_context>

<pallas_src>
import functools

import jax
import jax.numpy as jnp
from jax.experimental import pallas as pl
from jax.experimental.pallas import tpu as pltpu

HIDDEN = 128  # fixed by the module: n = 128


def dense_relu_kernel(x_ref, w_ref, b_ref, o_ref):
    # x_ref: (bm, obs_dim)  w_ref: (obs_dim, HIDDEN)  b_ref: (1, HIDDEN) f32
    # MXU matmul with f32 accumulation regardless of input dtype.
    y = jnp.dot(x_ref[...], w_ref[...], preferred_element_type=jnp.float32)
    y = y + b_ref[...]                         # bias add + relu in f32 (v5e-safe)
    o_ref[...] = jnp.maximum(y, 0.0).astype(o_ref.dtype)


def _pick_bm(B, max_bm=512):
    """Largest power-of-two batch tile (multiple of 16 for bf16 sublane packing),
    capped at max_bm, and <= B//2 when B is big enough so the 'parallel' batch
    axis keeps >=2 grid steps for v7x's two TensorCores."""
    target = max(min(max_bm, B // 2), 16)
    bm = 16
    while bm * 2 <= target:
        bm *= 2
    return bm


@functools.partial(jax.jit, static_argnames=("bm", "compute_dtype"))
def dqn_dense_forward(x, w, b, *, bm=None, compute_dtype=jnp.bfloat16):
    """relu(x @ w + b) via a Pallas kernel, tiled over the batch axis.

    x: [B, obs_dim], w: [obs_dim, 128] (PyTorch weight transposed), b: [128].
    Returns [B, 128] in x.dtype. Inputs are fed to the MXU in `compute_dtype`
    (bf16 by default) with f32 accumulation and an f32 epilogue.
    """
    B, obs_dim = x.shape
    out_dtype = x.dtype

    if bm is None:
        bm = _pick_bm(B)
    grid = pl.cdiv(B, bm)
    B_pad = grid * bm
    if B_pad != B:
        # Ragged batch: zero-pad (relu(0 @ W + b) rows are sliced off below).
        x = jnp.pad(x, ((0, B_pad - B), (0, 0)))

    xc = x.astype(compute_dtype)
    wc = w.astype(compute_dtype)
    b2 = b.reshape(1, HIDDEN).astype(jnp.float32)   # bias stays f32 (epilogue)

    itemsize = jnp.dtype(compute_dtype).itemsize
    cost = pl.CostEstimate(
        flops=2 * B_pad * obs_dim * HIDDEN,
        transcendentals=0,
        bytes_accessed=(B_pad * obs_dim * itemsize          # x
                        + obs_dim * HIDDEN * itemsize        # w (resident)
                        + HIDDEN * 4                         # bias
                        + B_pad * HIDDEN * jnp.dtype(out_dtype).itemsize),  # out
    )

    # TODO(synk): if the input pipeline allows, lane-pad obs_dim -> 128 upstream
    # (32-wide rows use 1/4 of each vreg's lanes); not worth an extra copy here.
    out = pl.pallas_call(
        dense_relu_kernel,
        out_shape=jax.ShapeDtypeStruct((B_pad, HIDDEN), out_dtype),
        grid_spec=pltpu.PrefetchScalarGridSpec(
            num_scalar_prefetch=0,
            grid=(grid,),
            in_specs=[
                pl.BlockSpec((bm, obs_dim), lambda i: (i, 0)),      # x tile
                pl.BlockSpec((obs_dim, HIDDEN), lambda i: (0, 0)),  # full W (resident)
                pl.BlockSpec((1, HIDDEN), lambda i: (0, 0)),        # bias (resident)
            ],
            out_specs=pl.BlockSpec((bm, HIDDEN), lambda i: (i, 0)),
        ),
        compiler_params=pltpu.CompilerParams(
            dimension_semantics=("parallel",)),
        cost_estimate=cost,
    )(xc, wc, b2)

    return out[:B] if B_pad != B else out


def init_dqn_dense_params(key, obs_dim):
    """Deterministic init mimicking nn.Linear's default U(-1/sqrt(in), 1/sqrt(in))."""
    kw, kb = jax.random.split(key)
    bound = 1.0 / jnp.sqrt(obs_dim)
    # PyTorch weight is [out, in]; we store it transposed as [in, out].
    w = jax.random.uniform(kw, (obs_dim, HIDDEN), jnp.float32, -bound, bound)
    b = jax.random.uniform(kb, (HIDDEN,), jnp.float32, -bound, bound)
    return w, b


if __name__ == "__main__":
    key = jax.random.PRNGKey(0)
    kx, kp, kr = jax.random.split(key, 3)

    B, obs_dim = 64, 32                      # observation_size = (32,)
    x = jax.random.normal(kx, (B, obs_dim), jnp.float32)
    w, b = init_dqn_dense_params(kp, obs_dim)
    ref = jnp.maximum(x @ w + b, 0.0)

    # 1) Exact-path check: f32 inputs through the kernel, tight tolerance.
    out_f32 = dqn_dense_forward(x, w, b, compute_dtype=jnp.float32)
    jax.block_until_ready(out_f32)
    assert out_f32.shape == (B, HIDDEN)
    assert jnp.allclose(out_f32, ref, atol=1e-5, rtol=1e-5)

    # 2) Default fast path: bf16 storage, f32 accumulation, looser tolerance.
    out_bf16 = dqn_dense_forward(x, w, b)
    jax.block_until_ready(out_bf16)
    assert out_bf16.shape == (B, HIDDEN)
    assert jnp.allclose(out_bf16, ref, atol=5e-2, rtol=5e-2)

    # 3) Ragged batch (not a multiple of the tile) exercises the pad/slice path.
    Br = 50
    xr = jax.random.normal(kr, (Br, obs_dim), jnp.float32)
    out_r = dqn_dense_forward(xr, w, b, compute_dtype=jnp.float32)
    jax.block_until_ready(out_r)
    ref_r = jnp.maximum(xr @ w + b, 0.0)
    assert out_r.shape == (Br, HIDDEN)
    assert jnp.allclose(out_r, ref_r, atol=1e-5, rtol=1e-5)

    # TODO(synk): conv branch (conv1/2/3) not exercised for dqn_dense (is_dense=True).
    print("KERNEL_OK")
</pallas_src>

<mosaic_0001>
module attributes {stable_mosaic.version = 11 : i64} {
  func.func @dense_relu_kernel(%arg0: i32, %arg1: memref<32x32xf32, #tpu.memory_space<vmem>>, %arg2: memref<32x128xf32, #tpu.memory_space<vmem>>, %arg3: memref<1x128xf32, #tpu.memory_space<vmem>>, %arg4: memref<32x128xf32, #tpu.memory_space<vmem>>) attributes {dimension_semantics = [#tpu.dimension_semantics<parallel>], iteration_bounds = array<i64: 2>, scalar_prefetch = 0 : i64, scratch_operands = 0 : i64, tpu.core_type = #tpu.core_type<tc>, window_params = [{transform_indices = @transform_0, window_bounds = array<i64: 32, 32>}, {pipeline_mode = #tpu.pipeline_mode<synchronous>, transform_indices = @transform_1, window_bounds = array<i64: 32, 128>}, {pipeline_mode = #tpu.pipeline_mode<synchronous>, transform_indices = @transform_2, window_bounds = array<i64: 1, 128>}, {transform_indices = @transform_3, window_bounds = array<i64: 32, 128>}]} {
    %c0 = arith.constant 0 : index
    %c0_0 = arith.constant 0 : index
    %0 = vector.load %arg1[%c0, %c0_0] : memref<32x32xf32, #tpu.memory_space<vmem>>, vector<32x32xf32>
    %c0_1 = arith.constant 0 : index
    %c0_2 = arith.constant 0 : index
    %1 = vector.load %arg2[%c0_1, %c0_2] : memref<32x128xf32, #tpu.memory_space<vmem>>, vector<32x128xf32>
    %cst = arith.constant dense<0.000000e+00> : vector<32x128xf32>
    %2 = tpu.matmul %0, %1, %cst {dimension_numbers = #tpu.dot_dimension_numbers<[1], [0], [0], [1], [0, 0, 1, 1], [], []>} : vector<32x32xf32>, vector<32x128xf32>, vector<32x128xf32> -> vector<32x128xf32>
    %c0_3 = arith.constant 0 : index
    %c0_4 = arith.constant 0 : index
    %3 = vector.load %arg3[%c0_3, %c0_4] : memref<1x128xf32, #tpu.memory_space<vmem>>, vector<1x128xf32>
    %4 = vector.broadcast %3 : vector<1x128xf32> to vector<32x128xf32>
    %5 = arith.addf %2, %4 : vector<32x128xf32>
    %cst_5 = arith.constant 0.000000e+00 : f32
    %6 = vector.broadcast %cst_5 : f32 to vector<32x128xf32>
    %7 = arith.maximumf %5, %6 : vector<32x128xf32>
    %c0_6 = arith.constant 0 : index
    %c0_7 = arith.constant 0 : index
    %8 = vector.load %arg4[%c0_6, %c0_7] : memref<32x128xf32, #tpu.memory_space<vmem>>, vector<32x128xf32>
    tpu.vector_store %arg4[%c0_6, %c0_7], %7 {strides = array<i32>} : memref<32x128xf32, #tpu.memory_space<vmem>>, vector<32x128xf32>,
    return
  }
  func.func @transform_0(%arg0: i32) -> (i32, i32) {
    %c0_i32 = arith.constant 0 : i32
    %c0_i32_0 = arith.constant 0 : i32
    return %arg0, %c0_i32 : i32, i32
  }
  func.func @transform_1(%arg0: i32) -> (i32, i32) {
    %c0_i32 = arith.constant 0 : i32
    %c0_i32_0 = arith.constant 0 : i32
    %c0_i32_1 = arith.constant 0 : i32
    return %c0_i32, %c0_i32_0 : i32, i32
  }
  func.func @transform_2(%arg0: i32) -> (i32, i32) {
    %c0_i32 = arith.constant 0 : i32
    %c0_i32_0 = arith.constant 0 : i32
    %c0_i32_1 = arith.constant 0 : i32
    return %c0_i32, %c0_i32_0 : i32, i32
  }
  func.func @transform_3(%arg0: i32) -> (i32, i32) {
    %c0_i32 = arith.constant 0 : i32
    %c0_i32_0 = arith.constant 0 : i32
    return %arg0, %c0_i32 : i32, i32
  }
}

</mosaic_0001>

<llo_original>
// kernel: dqn_dense_forward.1
$region0: #{dqn_dense_forward.1}
  #allocation0 [shape = 'u32[]', space=smem, size = 0x4, offset = 0x4, fixed_abs, tag = 'smem constant byte address 0x4 - core index']
  #allocation1 [shape = 'u32[144,128]{1,0:T(1,128)}', space=vmem, size = 0x12000, scoped, tag = 'internal scratch']
  %s0 = inlined_call_operand.vmem [shape: f32[64,32], index: 0, kind: input, shape index: {}]
  %s1 = inlined_call_operand.vmem [shape: f32[32,128], index: 1, kind: input, shape index: {}]
  %s2 = inlined_call_operand.vmem [shape: f32[1,128], index: 2, kind: input, shape index: {}]
  %s3 = inlined_call_operand.hbm [shape: f32[64,128], index: 3, kind: output, shape index: {}]
  %s4 = sld [smem:[#allocation0]]
  $region45: #{dqn_dense_forward.1} parent=0
    _
  %s6 = ssub.s32 1, %s4
  %s7 = scalar_select 0, %s6, %s4
  $region1: #{dqn_dense_forward.1} parent=0
    #allocation2 [shape = 'u8[32768]{0}', space=vmem, size = 0x8000, scoped, tag = 'output window, operand 0']
    #allocation3 [shape = 's32[2]{0}', space=sflag, size = 0x8, scoped, tag = 'scoped memory for dqn_dense_forward.1']
    %8 = vsyncpa [#allocation3], 0
    %s9 = scalar_lea.sflag [#allocation3], 1
    %10 = vsyncpa %s9, 0
    loop: start=0, step=1, limit=4
    $region2: #{dqn_dense_forward.1} parent=1 // loop_pre_header
      _
    $region3: #{dqn_dense_forward.1} parent=1 // loop_header
      %s12 = sphi 0, %s16
      %p13 = scmp.ge.s32.totalorder %s12, 4
      %s22 = sphi 0, %s24
      %s25 = sphi 0, %s22
      %s26 = sphi 0, %s25
      %s42 = sphi 0, %s26
      %s46 = sphi 0, %s46
      %s48 = sphi 0, %s46
      %s49 = sphi 0, %s48
      %s63 = sphi 0, %s49
      %s67 = sphi 0, %s67
      %s69 = sphi 0, %s67
      %s70 = sphi 0, %s69
      %s84 = sphi 0, %s70
      %s90 = sphi 0, %s92
      %s93 = sphi 0, %s90
      %s94 = sphi 0, %s93
      %s110 = sphi 0, %s94
    $region4: #{dqn_dense_forward.1} parent=1 // loop_header_branch
      %15 = sbr.rel (%p13) target = $region8
    $region5: #{dqn_dense_forward.1} parent=1 // loop_body
      %s17 = ssub.s32 %s12, 1
      %s18 = ssub.s32 %s12, 2
      %s19 = sadd.s32 %s12, 1
      %s20 = ssub.s32 %s12, %s19
      %p21 = scmp.eq.s32.totalorder %s20, 0
      %s23 = sadd.s32 %s22, 1
      %s24 = scalar_select %p21, %s22, %s23
      %p27 = pneg %p21
      %p28 = scmp.eq.s32.totalorder %s12, 1
      %p29 = por %p27, %p28
      %p30 = scmp.ne.s32.totalorder %s22, %s25
      %p31 = scmp.eq.s32.totalorder %s12, 0
      %p32 = por %p30, %p31
      %p33 = scmp.ne.s32.totalorder %s22, %s25
      %p34 = scmp.eq.s32.totalorder %s17, 1
      %p35 = por %p33, %p34
      %p36 = scmp.ne.s32.totalorder %s25, %s26
      %p37 = scmp.eq.s32.totalorder %s17, 0
      %p38 = por %p36, %p37
      %p39 = scmp.ne.s32.totalorder %s25, %s26
      %p40 = scmp.eq.s32.totalorder %s18, 1
      %p41 = por %p39, %p40
      %p43 = scmp.ne.s32.totalorder %s26, %s42
      %p44 = scmp.eq.s32.totalorder %s18, 0
      %p45 = por %p43, %p44
      %s47 = sadd.s32 %s46, 1
      %p50 = scmp.eq.s32.totalorder %s12, 1
      %p51 = scmp.ne.s32.totalorder %s46, %s48
      %p52 = scmp.eq.s32.totalorder %s12, 0
      %p53 = por %p51, %p52
      %p54 = scmp.ne.s32.totalorder %s46, %s48
      %p55 = scmp.eq.s32.totalorder %s17, 1
      %p56 = por %p54, %p55
      %p57 = scmp.ne.s32.totalorder %s48, %s49
      %p58 = scmp.eq.s32.totalorder %s17, 0
      %p59 = por %p57, %p58
      %p60 = scmp.ne.s32.totalorder %s48, %s49
      %p61 = scmp.eq.s32.totalorder %s18, 1
      %p62 = por %p60, %p61
      %p64 = scmp.ne.s32.totalorder %s49, %s63
      %p65 = scmp.eq.s32.totalorder %s18, 0
      %p66 = por %p64, %p65
      %s68 = sadd.s32 %s67, 1
      %p71 = scmp.eq.s32.totalorder %s12, 1
      %p72 = scmp.ne.s32.totalorder %s67, %s69
      %p73 = scmp.eq.s32.totalorder %s12, 0
      %p74 = por %p72, %p73
      %p75 = scmp.ne.s32.totalorder %s67, %s69
      %p76 = scmp.eq.s32.totalorder %s17, 1
      %p77 = por %p75, %p76
      %p78 = scmp.ne.s32.totalorder %s69, %s70
      %p79 = scmp.eq.s32.totalorder %s17, 0
      %p80 = por %p78, %p79
      %p81 = scmp.ne.s32.totalorder %s69, %s70
      %p82 = scmp.eq.s32.totalorder %s18, 1
      %p83 = por %p81, %p82
      %p85 = scmp.ne.s32.totalorder %s70, %s84
      %p86 = scmp.eq.s32.totalorder %s18, 0
      %p87 = por %p85, %p86
      %s88 = ssub.s32 %s12, %s19
      %p89 = scmp.eq.s32.totalorder %s88, 0
      %s91 = sadd.s32 %s90, 1
      %s92 = scalar_select %p89, %s90, %s91
      %p95 = pneg %p89
      %p96 = scmp.eq.s32.totalorder %s12, 1
      %p97 = por %p95, %p96
      %p98 = scmp.ne.s32.totalorder %s90, %s93
      %p99 = scmp.eq.s32.totalorder %s12, 0
      %p100 = por %p98, %p99
      %p101 = scmp.ne.s32.totalorder %s90, %s93
      %p102 = scmp.eq.s32.totalorder %s17, 1
      %p103 = por %p101, %p102
      %p104 = scmp.ne.s32.totalorder %s93, %s94
      %p105 = scmp.eq.s32.totalorder %s17, 0
      %p106 = por %p104, %p105
      %p107 = scmp.ne.s32.totalorder %s93, %s94
      %p108 = scmp.eq.s32.totalorder %s18, 1
      %p109 = por %p107, %p108
      %p111 = scmp.ne.s32.totalorder %s94, %s110
      %p112 = scmp.eq.s32.totalorder %s18, 0
      %p113 = por %p111, %p112
      %p114 = scmp.le.s32.totalorder 1, %s12
      %p115 = scmp.lt.s32.totalorder %s12, 3
      %p116 = pnand %p114, %p115
      %p117 = pneg %p116
      // Predicated region
      $region9: #{dqn_dense_forward.1} parent=5 // pred_check
        _
      $region10: #{dqn_dense_forward.1} parent=5 // pred_check_branch
        %119 = sbr.rel (%p116) target = $region12
      $region11: #{dqn_dense_forward.1} parent=5 // pred_region
        %s120 = ssub.s32 %s12, 1
        // Predicated region
        $region13: #{dqn_dense_forward.1} parent=11 // pred_check
          %p121 = pneg %p59
        $region14: #{dqn_dense_forward.1} parent=11 // pred_check_branch
          %123 = sbr.rel (%p121) target = $region16
        $region15: #{dqn_dense_forward.1} parent=11 // pred_region
          _
        $region16: #{dqn_dense_forward.1} parent=11 // pred_fallthru
          _
        // Predicated region
        $region17: #{dqn_dense_forward.1} parent=11 // pred_check
          %p124 = pneg %p80
        $region18: #{dqn_dense_forward.1} parent=11 // pred_check_branch
          %126 = sbr.rel (%p124) target = $region20
        $region19: #{dqn_dense_forward.1} parent=11 // pred_region
          _
        $region20: #{dqn_dense_forward.1} parent=11 // pred_fallthru
          _
      $region12: #{dqn_dense_forward.1} parent=5 // pred_fallthru
        _
      %p127 = scmp.lt.s32.totalorder %s12, 2
      // Predicated region
      $region21: #{dqn_dense_forward.1} parent=5 // pred_check
        %p128 = pneg %p127
      $region22: #{dqn_dense_forward.1} parent=5 // pred_check_branch
        %130 = sbr.rel (%p128) target = $region24
      $region23: #{dqn_dense_forward.1} parent=5 // pred_region
        // Predicated region
        $region25: #{dqn_dense_forward.1} parent=23 // pred_check
          %p131 = pneg %p32
        $region26: #{dqn_dense_forward.1} parent=23 // pred_check_branch
          %133 = sbr.rel (%p131) target = $region28
        $region27: #{dqn_dense_forward.1} parent=23 // pred_region
          %s134 = smul.u32 4, %s12
          %p135 = scmp.lt.s32.totalorder %s134, 7
          %s136 = scalar_select %p135, %s134, 7
          %s137 = smul.addr %s136, 8
          %s138 = scalar_lea.vmem %s0, %s137
          %s139 = smul.u32 4, %s12
        $region28: #{dqn_dense_forward.1} parent=23 // pred_fallthru
          _
      $region24: #{dqn_dense_forward.1} parent=5 // pred_fallthru
        _
      %p140 = scmp.le.s32.totalorder 1, %s12
      %p141 = scmp.lt.s32.totalorder %s12, 3
      %p142 = pnand %p140, %p141
      %p143 = pneg %p142
      // Predicated region
      $region29: #{dqn_dense_forward.1} parent=5 // pred_check
        _
      $region30: #{dqn_dense_forward.1} parent=5 // pred_check_branch
        %145 = sbr.rel (%p142) target = $region32
      $region31: #{dqn_dense_forward.1} parent=5 // pred_region
        %s146 = ssub.s32 %s12, 1
        %s147 = smul.u32 4, %s17
        %p148 = scmp.lt.s32.totalorder %s147, 7
        %s149 = scalar_select %p148, %s147, 7
        %s150 = smul.addr %s149, 8
        %s151 = scalar_lea.vmem %s0, %s150
        %p152 = pneg %p38
        %p153 = pneg %p35
        %p154 = pneg %p59
        %p155 = pneg %p56
        %p156 = pneg %p80
        %p157 = pneg %p77
        %p158 = pneg %p106
        %p159 = pneg %p103
        %s160 = sand.u32 %s93, 1
        %s161 = scalar_lea.sflag [#allocation3], %s160
        %s162 = sand.u32 %s93, 1
        %s163 = smul.addr %s162, 32
        %s164 = scalar_lea.vmem [#allocation2], %s163
        %s165 = smul.u32 4, %s17
        %p166 = scmp.lt.s32.totalorder %s165, 7
        %s167 = scalar_select %p166, %s165, 7
        %s168 = smul.addr %s167, 8
        %s169 = scalar_lea.vmem %s0, %s168
        %s170 = smul.u32 4, %s17
        %s171 = smul.u32 4, %s17
        %v172 = vld [vmem:[%s169] sm:$0xff]
        %v173 = vld [vmem:[%s169 + $0x8] sm:$0xff]
        %v174 = vld [vmem:[%s169 + $0x10] sm:$0xff]
        %v175 = vld [vmem:[%s169 + $0x18] sm:$0xff]
        %v176 = vld [vmem:[%s1] sm:$0xff]
        %v177 = vld [vmem:[%s1 + $0x8] sm:$0xff]
        %v178 = vld [vmem:[%s1 + $0x10] sm:$0xff]
        %v179 = vld [vmem:[%s1 + $0x18] sm:$0xff]
        %v180 = vld [vmem:[%s2] sm:$0x1]
        %v182 = vlaneseq
        %v183 = vshrl.u32 %v182, 7
        %v184 = vsub.s32 0, %v183
        %v185 = vrot.slane %v180, %v184
        %vm187 = vcmask 261120
        %v189 = vsel %vm187, %v172, 0
        %v192 = vsel %vm187, %v173, 0
        %v195 = vsel %vm187, %v174, 0
        %v198 = vsel %vm187, %v175, 0
        %200 = vmatprep.subr.mxu0 0.0
        %201 = vmatpush1.msra.mxu0 %v176
        %202 = vmatprep.subr.mxu0 0.0
        %203 = vmatpush1.msra.mxu0 %v177
        %204 = vmatprep.subr.mxu0 0.0
        %205 = vmatpush1.msra.mxu0 %v178
        %206 = vmatprep.subr.mxu0 0.0
        %207 = vmatpush1.msra.mxu0 %v179
        %208 = vmatprep.subr.mxu0 0.0
        %209 = vmatpush1.msra.mxu0 0.0
        %210 = vmatprep.subr.mxu0 0.0
        %211 = vmatpush1.msra.mxu0 0.0
        %212 = vmatprep.subr.mxu0 0.0
        %213 = vmatpush1.msra.mxu0 0.0
        %214 = vmatprep.subr.mxu0 0.0
        %215 = vmatpush1.msra.mxu0 0.0
        %216 = vmatprep.subr.mxu0 0.0
        %217 = vmatpush1.msra.mxu0 0.0
        %218 = vmatprep.subr.mxu0 0.0
        %219 = vmatpush1.msra.mxu0 0.0
        %220 = vmatprep.subr.mxu0 0.0
        %221 = vmatpush1.msra.mxu0 0.0
        %222 = vmatprep.subr.mxu0 0.0
        %223 = vmatpush1.msra.mxu0 0.0
        %224 = vmatprep.subr.mxu0 0.0
        %225 = vmatpush1.msra.mxu0 0.0
        %226 = vmatprep.subr.mxu0 0.0
        %227 = vmatpush1.msra.mxu0 0.0
        %228 = vmatprep.subr.mxu0 0.0
        %229 = vmatpush1.msra.mxu0 0.0
        %230 = vmatprep.subr.mxu0 0.0
        %231 = vmatpush1.msra.mxu0 0.0
        %232 = vmatprep.subr.mxu0 0.0
        %233 = vmatpush1.msra.mxu0 0.0
        %234 = vmatprep.subr.mxu0 0.0
        %235 = vmatpush1.msra.mxu0 0.0
        %236 = vmatprep.subr.mxu0 0.0
        %237 = vmatpush1.msra.mxu0 0.0
        %238 = vmatprep.subr.mxu0 0.0
        %239 = vmatpush1.msra.mxu0 0.0
        %240 = vmatprep.subr.mxu0 0.0
        %241 = vmatpush1.msra.mxu0 0.0
        %242 = vmatprep.subr.mxu0 0.0
        %243 = vmatpush1.msra.mxu0 0.0
        %244 = vmatprep.subr.mxu0 0.0
        %245 = vmatpush1.msra.mxu0 0.0
        %246 = vmatprep.subr.mxu0 0.0
        %247 = vmatpush1.msra.mxu0 0.0
        %248 = vmatprep.subr.mxu0 0.0
        %249 = vmatpush1.msra.mxu0 0.0
        %250 = vmatprep.subr.mxu0 0.0
        %251 = vmatpush1.msra.mxu0 0.0
        %252 = vmatprep.subr.mxu0 0.0
        %253 = vmatpush1.msra.mxu0 0.0
        %254 = vmatprep.subr.mxu0 0.0
        %255 = vmatpush1.msra.mxu0 0.0
        %256 = vmatprep.subr.mxu0 0.0
        %257 = vmatpush1.msra.mxu0 0.0
        %258 = vmatprep.subr.mxu0 0.0
        %259 = vmatpush1.msra.mxu0 0.0
        %260 = vmatprep.subr.mxu0 0.0
        %261 = vmatpush1.msra.mxu0 0.0
        %262 = vmatprep.subr.mxu0 0.0
        %263 = vmatpush1.msra.mxu0 0.0
        %264 = vmatprep.mubr.f32.mxu0 0.0
        %265 = vmatmul.mubr.f32.gmra.mrb[0].mxu0 %v189
        %v266 = vpop.f32.mrb[0].mxu0
        %v267 = vadd.f32 %v185, %v266
        %v268 = vpop.f32.mrb[0].mxu0
        %269 = vmatprep.mubr.f32.mxu0 0.0
        %270 = vmatmul.mubr.f32.gmra.mrb[0].mxu0 %v192
        %v271 = vpop.f32.mrb[0].mxu0
        %v272 = vadd.f32 %v185, %v271
        %v273 = vpop.f32.mrb[0].mxu0
        %274 = vmatprep.mubr.f32.mxu0 0.0
        %275 = vmatmul.mubr.f32.gmra.mrb[0].mxu0 %v195
        %v276 = vpop.f32.mrb[0].mxu0
        %v277 = vadd.f32 %v185, %v276
        %v278 = vpop.f32.mrb[0].mxu0
        %279 = vmatprep.mubr.f32.mxu0 0.0
        %280 = vmatmul.mubr.f32.gmra.mrb[0].mxu0 %v198
        %v281 = vpop.f32.mrb[0].mxu0
        %v282 = vadd.f32 %v185, %v281
        %v283 = vpop.f32.mrb[0].mxu0
        %284 = vdwg.mxu0
        %v285 = vmax.f32 %v267, 0.0
        %v286 = vmax.f32 %v272, 0.0
        %v287 = vmax.f32 %v277, 0.0
        %v288 = vmax.f32 %v282, 0.0
        %289 = vst [vmem:[%s164] sm:$0xff] %v285
        %290 = vst [vmem:[%s164 + $0x8] sm:$0xff] %v286
        %291 = vst [vmem:[%s164 + $0x10] sm:$0xff] %v287
        %292 = vst [vmem:[%s164 + $0x18] sm:$0xff] %v288
        %s293 = sand.u32 %s93, 1
        %s294 = scalar_lea.sflag [#allocation3], %s293
        %s295 = sand.u32 %s93, 1
        %s296 = smul.addr %s295, 32
        %s297 = scalar_lea.vmem [#allocation2], %s296
        // Predicated region
        $region33: #{dqn_dense_forward.1} parent=31 // pred_check
          %p298 = pneg %p103
        $region34: #{dqn_dense_forward.1} parent=31 // pred_check_branch
          %300 = sbr.rel (%p298) target = $region36
        $region35: #{dqn_dense_forward.1} parent=31 // pred_region
          %s301 = smul.u32 4, %s17
          %s303 = ssub.s32 512, 512
          %304 = vsyncadd %s294, %s303
          %s305 = smul.addr %s301, 128
          %s306 = scalar_lea.hbm %s3, %s305
          %s307 = sshll.u32 %s297, 4
          %s308 = int_to_ptr.vmem [resolvable:$true] %s307
          %313 = dma.vmem_to_hbm [thread:$0]  %s308, 512, %s306, %s294, 128, 128, 8
        $region36: #{dqn_dense_forward.1} parent=31 // pred_fallthru
          _
      $region32: #{dqn_dense_forward.1} parent=5 // pred_fallthru
        _
      %p314 = scmp.le.s32.totalorder 2, %s12
      // Predicated region
      $region37: #{dqn_dense_forward.1} parent=5 // pred_check
        %p315 = pneg %p314
      $region38: #{dqn_dense_forward.1} parent=5 // pred_check_branch
        %317 = sbr.rel (%p315) target = $region40
      $region39: #{dqn_dense_forward.1} parent=5 // pred_region
        %s318 = ssub.s32 %s12, 2
        // Predicated region
        $region41: #{dqn_dense_forward.1} parent=39 // pred_check
          %p319 = pneg %p109
        $region42: #{dqn_dense_forward.1} parent=39 // pred_check_branch
          %321 = sbr.rel (%p319) target = $region44
        $region43: #{dqn_dense_forward.1} parent=39 // pred_region
          %s322 = sand.u32 %s94, 1
          %s323 = scalar_lea.sflag [#allocation3], %s322
          %s324 = sand.u32 %s94, 1
          %s325 = smul.addr %s324, 32
          %s326 = scalar_lea.vmem [#allocation2], %s325
          %327 = dma.done %s323, 512
        $region44: #{dqn_dense_forward.1} parent=39 // pred_fallthru
          _
      $region40: #{dqn_dense_forward.1} parent=5 // pred_fallthru
        _
    $region6: #{dqn_dense_forward.1} parent=1 // loop_footer
      %s16 = sadd.s32 1, %s12
    $region7: #{dqn_dense_forward.1} parent=1 // loop_footer_branch
      %11 = sbr.rel target = $region3
    $region8: #{dqn_dense_forward.1} parent=1 // loop_exit
      _
    %328 = vsyncpa [#allocation3], 1
    %s329 = scalar_lea.sflag [#allocation3], 1
    %330 = vsyncpa %s329, 1

</llo_original>
